<compile_context>
chip_gen: v7x
topology: tpu7x:2x2x1
jax: 0.10.0
libtpu: 0.0.40
codegen_flags: <defaults>
</compile_context>

<pallas_src>
import math

import jax
import jax.numpy as jnp
from jax.experimental import pallas as pl
from jax.experimental.pallas import tpu as pltpu

_LANES = 128


def _round_up(a: int, b: int) -> int:
    return ((a + b - 1) // b) * b


def _make_kernel(w: int):
    """Kernel over a (TR, k*w) input block -> (TR, k) block of L2 norms."""
    if w == 1:
        def kernel(x_ref, s_ref, o_ref):  # norm over length-1 axis is |x|
            o_ref[...] = jnp.abs(x_ref[...]).astype(o_ref.dtype)
        return kernel

    def kernel(x_ref, s_ref, o_ref):
        x = x_ref[...].astype(jnp.float32)
        # Segmented sum-of-squares via a tiny MXU matmul against the constant
        # block-diagonal selector (VPU does only the squaring, XLU is unused).
        ssq = jnp.dot(x * x, s_ref[...], preferred_element_type=jnp.float32)
        o_ref[...] = jnp.sqrt(ssq).astype(o_ref.dtype)

    return kernel


def l2_norm_last_dim(x):
    """Equivalent of torch.norm(x, dim=-1) (L2 norm over the last axis)."""
    orig_shape = x.shape
    w = int(orig_shape[-1])
    r = int(math.prod(orig_shape[:-1]))

    # torch.norm promotes non-float inputs; keep float dtypes as-is.
    if not jnp.issubdtype(x.dtype, jnp.floating):
        x = x.astype(jnp.float32)
    out_dtype = x.dtype

    if r == 0 or w == 0:
        return jnp.zeros(orig_shape[:-1], dtype=out_dtype)

    itemsize = jnp.dtype(x.dtype).itemsize
    sub_align = max(8, 32 // itemsize)  # 8 for f32, 16 for bf16, ...

    # ---- lane packing: k original rows side by side -> 128-lane-dense rows --
    if w <= _LANES and _LANES % w == 0 and r % (_LANES // w) == 0:
        k = _LANES // w                  # e.g. W=16 -> k=8, packed width 128
    else:
        k = 1                            # wide / ragged case: one row per row
    wp = k * w                           # packed row width (lane axis)
    rp = r // k                          # packed row count (exact, no padding)

    x2d = x.reshape(rp, wp)              # contiguous => free reshape, no copy

    # ---- row-tile sizing from a VMEM budget (double-buffered in + out) ------
    lane_in = _round_up(wp, _LANES)
    lane_out = _round_up(k, _LANES)      # narrow outputs are lane-padded in VMEM
    total_budget = 36 * 1024 * 1024      # 2*(in + padded out) must fit this
    per_in_cap = 8 * 1024 * 1024         # ~8 MiB DMAs amortize per-step overhead
    tr = total_budget // (2 * (lane_in + lane_out) * itemsize)
    tr = min(tr, per_in_cap // (lane_in * itemsize))
    tr = max(sub_align, (tr // sub_align) * sub_align)
    if rp >= sub_align:
        # keep >= ~8 grid steps when possible (>= 2 per TensorCore on v7x)
        tr = min(tr, max(sub_align, _round_up(-(-rp // 8), sub_align)))
    else:
        tr = rp                          # tiny input: single full-extent block
    grid = -(-rp // tr)                  # ragged last block handled by Pallas

    # ---- constant block-diagonal selector: S[l, g] = 1 iff l // W == g ------
    s = (jnp.arange(wp, dtype=jnp.int32)[:, None] // w
         == jnp.arange(k, dtype=jnp.int32)[None, :]).astype(jnp.float32)

    cost = pl.CostEstimate(
        flops=r * w * (1 + 2 * k),
        transcendentals=r,
        bytes_accessed=r * w * itemsize + r * itemsize,
    )

    out = pl.pallas_call(
        _make_kernel(w),
        out_shape=jax.ShapeDtypeStruct((rp, k), out_dtype),
        grid_spec=pltpu.PrefetchScalarGridSpec(
            num_scalar_prefetch=0,
            grid=(grid,),
            in_specs=[
                pl.BlockSpec((tr, wp), lambda i: (i, 0)),
                pl.BlockSpec((wp, k), lambda i: (0, 0)),   # resident selector
            ],
            out_specs=pl.BlockSpec((tr, k), lambda i: (i, 0)),
        ),
        compiler_params=pltpu.CompilerParams(
            dimension_semantics=("parallel",),
            vmem_limit_bytes=48 * 1024 * 1024,
        ),
        cost_estimate=cost,
    )(x2d, s)

    # (rp, k) is dense in HBM in exactly original row order: free reshape back.
    return out.reshape(orig_shape[:-1])


if __name__ == "__main__":
    key = jax.random.PRNGKey(0)
    x = jax.random.normal(key, (2, 4, 16, 16), dtype=jnp.float32)

    out = jax.jit(l2_norm_last_dim)(x)
    out = jax.block_until_ready(out)

    ref = jnp.sqrt(jnp.sum(x.astype(jnp.float32) ** 2, axis=-1))
    assert out.shape == (2, 4, 16), out.shape
    assert bool(jnp.allclose(out, ref.astype(out.dtype), rtol=5e-3, atol=1e-5)), (
        float(jnp.max(jnp.abs(out - ref))))

    print("KERNEL_OK")
</pallas_src>

<mosaic_0001>
module attributes {stable_mosaic.version = 11 : i64} {
  func.func @kernel(%arg0: i32, %arg1: memref<8x128xf32, #tpu.memory_space<vmem>>, %arg2: memref<128x8xf32, #tpu.memory_space<vmem>>, %arg3: memref<8x8xf32, #tpu.memory_space<vmem>>) attributes {dimension_semantics = [#tpu.dimension_semantics<parallel>], iteration_bounds = array<i64: 2>, scalar_prefetch = 0 : i64, scratch_operands = 0 : i64, tpu.core_type = #tpu.core_type<tc>, window_params = [{transform_indices = @transform_0, window_bounds = array<i64: 8, 128>}, {pipeline_mode = #tpu.pipeline_mode<synchronous>, transform_indices = @transform_1, window_bounds = array<i64: 128, 8>}, {transform_indices = @transform_2, window_bounds = array<i64: 8, 8>}]} {
    %c0 = arith.constant 0 : index
    %c0_0 = arith.constant 0 : index
    %0 = vector.load %arg1[%c0, %c0_0] : memref<8x128xf32, #tpu.memory_space<vmem>>, vector<8x128xf32>
    %1 = arith.mulf %0, %0 : vector<8x128xf32>
    %c0_1 = arith.constant 0 : index
    %c0_2 = arith.constant 0 : index
    %2 = vector.load %arg2[%c0_1, %c0_2] : memref<128x8xf32, #tpu.memory_space<vmem>>, vector<128x8xf32>
    %cst = arith.constant dense<0.000000e+00> : vector<8x8xf32>
    %3 = tpu.matmul %1, %2, %cst {dimension_numbers = #tpu.dot_dimension_numbers<[1], [0], [0], [1], [0, 0, 1, 1], [], []>} : vector<8x128xf32>, vector<128x8xf32>, vector<8x8xf32> -> vector<8x8xf32>
    %4 = math.sqrt %3 : vector<8x8xf32>
    %c0_3 = arith.constant 0 : index
    %c0_4 = arith.constant 0 : index
    %5 = vector.load %arg3[%c0_3, %c0_4] : memref<8x8xf32, #tpu.memory_space<vmem>>, vector<8x8xf32>
    tpu.vector_store %arg3[%c0_3, %c0_4], %4 {strides = array<i32>} : memref<8x8xf32, #tpu.memory_space<vmem>>, vector<8x8xf32>,
    return
  }
  func.func @transform_0(%arg0: i32) -> (i32, i32) {
    %c0_i32 = arith.constant 0 : i32
    %c0_i32_0 = arith.constant 0 : i32
    return %arg0, %c0_i32 : i32, i32
  }
  func.func @transform_1(%arg0: i32) -> (i32, i32) {
    %c0_i32 = arith.constant 0 : i32
    %c0_i32_0 = arith.constant 0 : i32
    %c0_i32_1 = arith.constant 0 : i32
    return %c0_i32, %c0_i32_0 : i32, i32
  }
  func.func @transform_2(%arg0: i32) -> (i32, i32) {
    %c0_i32 = arith.constant 0 : i32
    %c0_i32_0 = arith.constant 0 : i32
    return %arg0, %c0_i32 : i32, i32
  }
}

</mosaic_0001>

<llo_original>
// kernel: l2_norm_last_dim.1
$region0: #{l2_norm_last_dim.1}
  #allocation0 [shape = 'u32[]', space=smem, size = 0x4, offset = 0x4, fixed_abs, tag = 'smem constant byte address 0x4 - core index']
  #allocation1 [shape = 'u32[144,128]{1,0:T(1,128)}', space=vmem, size = 0x12000, scoped, tag = 'internal scratch']
  %s0 = inlined_call_operand.vmem [shape: f32[16,128], index: 0, kind: input, shape index: {}]
  %s1 = inlined_call_operand.vmem [shape: f32[128,8], index: 1, kind: input, shape index: {}]
  %s2 = inlined_call_operand.vmem [shape: f32[16,8], index: 2, kind: output, shape index: {}]
  %s3 = sld [smem:[#allocation0]]
  $region41: #{l2_norm_last_dim.1} parent=0
    _
  %s5 = ssub.s32 1, %s3
  %s6 = scalar_select 0, %s5, %s3
  loop: start=0, step=1, limit=4
  $region2: #{l2_norm_last_dim.1} parent=0 // loop_pre_header
    _
  $region3: #{l2_norm_last_dim.1} parent=0 // loop_header
    %s8 = sphi 0, %s12
    %p9 = scmp.ge.s32.totalorder %s8, 4
    %s18 = sphi 0, %s20
    %s21 = sphi 0, %s18
    %s22 = sphi 0, %s21
    %s38 = sphi 0, %s22
    %s42 = sphi 0, %s42
    %s44 = sphi 0, %s42
    %s45 = sphi 0, %s44
    %s59 = sphi 0, %s45
    %s65 = sphi 0, %s67
    %s68 = sphi 0, %s65
    %s69 = sphi 0, %s68
    %s85 = sphi 0, %s69
  $region4: #{l2_norm_last_dim.1} parent=0 // loop_header_branch
    %11 = sbr.rel (%p9) target = $region8
  $region5: #{l2_norm_last_dim.1} parent=0 // loop_body
    %s13 = ssub.s32 %s8, 1
    %s14 = ssub.s32 %s8, 2
    %s15 = sadd.s32 %s8, 1
    %s16 = ssub.s32 %s8, %s15
    %p17 = scmp.eq.s32.totalorder %s16, 0
    %s19 = sadd.s32 %s18, 1
    %s20 = scalar_select %p17, %s18, %s19
    %p23 = pneg %p17
    %p24 = scmp.eq.s32.totalorder %s8, 1
    %p25 = por %p23, %p24
    %p26 = scmp.ne.s32.totalorder %s18, %s21
    %p27 = scmp.eq.s32.totalorder %s8, 0
    %p28 = por %p26, %p27
    %p29 = scmp.ne.s32.totalorder %s18, %s21
    %p30 = scmp.eq.s32.totalorder %s13, 1
    %p31 = por %p29, %p30
    %p32 = scmp.ne.s32.totalorder %s21, %s22
    %p33 = scmp.eq.s32.totalorder %s13, 0
    %p34 = por %p32, %p33
    %p35 = scmp.ne.s32.totalorder %s21, %s22
    %p36 = scmp.eq.s32.totalorder %s14, 1
    %p37 = por %p35, %p36
    %p39 = scmp.ne.s32.totalorder %s22, %s38
    %p40 = scmp.eq.s32.totalorder %s14, 0
    %p41 = por %p39, %p40
    %s43 = sadd.s32 %s42, 1
    %p46 = scmp.eq.s32.totalorder %s8, 1
    %p47 = scmp.ne.s32.totalorder %s42, %s44
    %p48 = scmp.eq.s32.totalorder %s8, 0
    %p49 = por %p47, %p48
    %p50 = scmp.ne.s32.totalorder %s42, %s44
    %p51 = scmp.eq.s32.totalorder %s13, 1
    %p52 = por %p50, %p51
    %p53 = scmp.ne.s32.totalorder %s44, %s45
    %p54 = scmp.eq.s32.totalorder %s13, 0
    %p55 = por %p53, %p54
    %p56 = scmp.ne.s32.totalorder %s44, %s45
    %p57 = scmp.eq.s32.totalorder %s14, 1
    %p58 = por %p56, %p57
    %p60 = scmp.ne.s32.totalorder %s45, %s59
    %p61 = scmp.eq.s32.totalorder %s14, 0
    %p62 = por %p60, %p61
    %s63 = ssub.s32 %s8, %s15
    %p64 = scmp.eq.s32.totalorder %s63, 0
    %s66 = sadd.s32 %s65, 1
    %s67 = scalar_select %p64, %s65, %s66
    %p70 = pneg %p64
    %p71 = scmp.eq.s32.totalorder %s8, 1
    %p72 = por %p70, %p71
    %p73 = scmp.ne.s32.totalorder %s65, %s68
    %p74 = scmp.eq.s32.totalorder %s8, 0
    %p75 = por %p73, %p74
    %p76 = scmp.ne.s32.totalorder %s65, %s68
    %p77 = scmp.eq.s32.totalorder %s13, 1
    %p78 = por %p76, %p77
    %p79 = scmp.ne.s32.totalorder %s68, %s69
    %p80 = scmp.eq.s32.totalorder %s13, 0
    %p81 = por %p79, %p80
    %p82 = scmp.ne.s32.totalorder %s68, %s69
    %p83 = scmp.eq.s32.totalorder %s14, 1
    %p84 = por %p82, %p83
    %p86 = scmp.ne.s32.totalorder %s69, %s85
    %p87 = scmp.eq.s32.totalorder %s14, 0
    %p88 = por %p86, %p87
    %p89 = scmp.le.s32.totalorder 1, %s8
    %p90 = scmp.lt.s32.totalorder %s8, 3
    %p91 = pnand %p89, %p90
    %p92 = pneg %p91
    // Predicated region
    $region9: #{l2_norm_last_dim.1} parent=5 // pred_check
      _
    $region10: #{l2_norm_last_dim.1} parent=5 // pred_check_branch
      %94 = sbr.rel (%p91) target = $region12
    $region11: #{l2_norm_last_dim.1} parent=5 // pred_region
      %s95 = ssub.s32 %s8, 1
      // Predicated region
      $region13: #{l2_norm_last_dim.1} parent=11 // pred_check
        %p96 = pneg %p55
      $region14: #{l2_norm_last_dim.1} parent=11 // pred_check_branch
        %98 = sbr.rel (%p96) target = $region16
      $region15: #{l2_norm_last_dim.1} parent=11 // pred_region
        _
      $region16: #{l2_norm_last_dim.1} parent=11 // pred_fallthru
        _
    $region12: #{l2_norm_last_dim.1} parent=5 // pred_fallthru
      _
    %p99 = scmp.lt.s32.totalorder %s8, 2
    // Predicated region
    $region17: #{l2_norm_last_dim.1} parent=5 // pred_check
      %p100 = pneg %p99
    $region18: #{l2_norm_last_dim.1} parent=5 // pred_check_branch
      %102 = sbr.rel (%p100) target = $region20
    $region19: #{l2_norm_last_dim.1} parent=5 // pred_region
      // Predicated region
      $region21: #{l2_norm_last_dim.1} parent=19 // pred_check
        %p103 = pneg %p28
      $region22: #{l2_norm_last_dim.1} parent=19 // pred_check_branch
        %105 = sbr.rel (%p103) target = $region24
      $region23: #{l2_norm_last_dim.1} parent=19 // pred_region
        %p106 = scmp.lt.s32.totalorder %s8, 1
        %s107 = scalar_select %p106, %s8, 1
        %s108 = smul.addr %s107, 8
        %s109 = scalar_lea.vmem %s0, %s108
      $region24: #{l2_norm_last_dim.1} parent=19 // pred_fallthru
        _
    $region20: #{l2_norm_last_dim.1} parent=5 // pred_fallthru
      _
    %p110 = scmp.le.s32.totalorder 1, %s8
    %p111 = scmp.lt.s32.totalorder %s8, 3
    %p112 = pnand %p110, %p111
    %p113 = pneg %p112
    // Predicated region
    $region25: #{l2_norm_last_dim.1} parent=5 // pred_check
      _
    $region26: #{l2_norm_last_dim.1} parent=5 // pred_check_branch
      %115 = sbr.rel (%p112) target = $region28
    $region27: #{l2_norm_last_dim.1} parent=5 // pred_region
      %s116 = ssub.s32 %s8, 1
      %p117 = scmp.lt.s32.totalorder %s13, 1
      %s118 = scalar_select %p117, %s13, 1
      %s119 = smul.addr %s118, 8
      %s120 = scalar_lea.vmem %s0, %s119
      %p121 = pneg %p34
      %p122 = pneg %p31
      %p123 = pneg %p55
      %p124 = pneg %p52
      %p125 = pneg %p81
      %p126 = pneg %p78
      %p127 = scmp.lt.s32.totalorder %s13, 1
      %s128 = scalar_select %p127, %s13, 1
      %s129 = smul.addr %s128, 8
      %s130 = scalar_lea.vmem %s2, %s129
      %p131 = scmp.lt.s32.totalorder %s13, 1
      %s132 = scalar_select %p131, %s13, 1
      %s133 = smul.addr %s132, 8
      %s134 = scalar_lea.vmem %s0, %s133
      %p135 = scmp.lt.s32.totalorder %s13, 1
      %s136 = scalar_select %p135, %s13, 1
      %s137 = smul.addr %s136, 8
      %s138 = scalar_lea.vmem %s2, %s137
      %v139 = vld [vmem:[%s134] sm:$0xff]
      %v140 = vmul.f32 %v139, %v139
      %v141 = vld [vmem:[%s1] sm:$0xff]
      %v142 = vld [vmem:[%s1 + $0x8] sm:$0xff]
      %v143 = vld [vmem:[%s1 + $0x10] sm:$0xff]
      %v144 = vld [vmem:[%s1 + $0x18] sm:$0xff]
      %v145 = vld [vmem:[%s1 + $0x20] sm:$0xff]
      %v146 = vld [vmem:[%s1 + $0x28] sm:$0xff]
      %v147 = vld [vmem:[%s1 + $0x30] sm:$0xff]
      %v148 = vld [vmem:[%s1 + $0x38] sm:$0xff]
      %v149 = vld [vmem:[%s1 + $0x40] sm:$0xff]
      %v150 = vld [vmem:[%s1 + $0x48] sm:$0xff]
      %v151 = vld [vmem:[%s1 + $0x50] sm:$0xff]
      %v152 = vld [vmem:[%s1 + $0x58] sm:$0xff]
      %v153 = vld [vmem:[%s1 + $0x60] sm:$0xff]
      %v154 = vld [vmem:[%s1 + $0x68] sm:$0xff]
      %v155 = vld [vmem:[%s1 + $0x70] sm:$0xff]
      %v156 = vld [vmem:[%s1 + $0x78] sm:$0xff]
      %157 = vmatprep.subr.mxu0 0.0
      %158 = vmatpush1.msra.mxu0 %v141
      %159 = vmatprep.subr.mxu0 0.0
      %160 = vmatpush1.msra.mxu0 %v142
      %161 = vmatprep.subr.mxu0 0.0
      %162 = vmatpush1.msra.mxu0 %v143
      %163 = vmatprep.subr.mxu0 0.0
      %164 = vmatpush1.msra.mxu0 %v144
      %165 = vmatprep.subr.mxu0 0.0
      %166 = vmatpush1.msra.mxu0 %v145
      %167 = vmatprep.subr.mxu0 0.0
      %168 = vmatpush1.msra.mxu0 %v146
      %169 = vmatprep.subr.mxu0 0.0
      %170 = vmatpush1.msra.mxu0 %v147
      %171 = vmatprep.subr.mxu0 0.0
      %172 = vmatpush1.msra.mxu0 %v148
      %173 = vmatprep.subr.mxu0 0.0
      %174 = vmatpush1.msra.mxu0 %v149
      %175 = vmatprep.subr.mxu0 0.0
      %176 = vmatpush1.msra.mxu0 %v150
      %177 = vmatprep.subr.mxu0 0.0
      %178 = vmatpush1.msra.mxu0 %v151
      %179 = vmatprep.subr.mxu0 0.0
      %180 = vmatpush1.msra.mxu0 %v152
      %181 = vmatprep.subr.mxu0 0.0
      %182 = vmatpush1.msra.mxu0 %v153
      %183 = vmatprep.subr.mxu0 0.0
      %184 = vmatpush1.msra.mxu0 %v154
      %185 = vmatprep.subr.mxu0 0.0
      %186 = vmatpush1.msra.mxu0 %v155
      %187 = vmatprep.subr.mxu0 0.0
      %188 = vmatpush1.msra.mxu0 %v156
      %189 = vmatprep.subr.mxu0 0.0
      %190 = vmatpush1.msra.mxu0 0.0
      %191 = vmatprep.subr.mxu0 0.0
      %192 = vmatpush1.msra.mxu0 0.0
      %193 = vmatprep.subr.mxu0 0.0
      %194 = vmatpush1.msra.mxu0 0.0
      %195 = vmatprep.subr.mxu0 0.0
      %196 = vmatpush1.msra.mxu0 0.0
      %197 = vmatprep.subr.mxu0 0.0
      %198 = vmatpush1.msra.mxu0 0.0
      %199 = vmatprep.subr.mxu0 0.0
      %200 = vmatpush1.msra.mxu0 0.0
      %201 = vmatprep.subr.mxu0 0.0
      %202 = vmatpush1.msra.mxu0 0.0
      %203 = vmatprep.subr.mxu0 0.0
      %204 = vmatpush1.msra.mxu0 0.0
      %205 = vmatprep.subr.mxu0 0.0
      %206 = vmatpush1.msra.mxu0 0.0
      %207 = vmatprep.subr.mxu0 0.0
      %208 = vmatpush1.msra.mxu0 0.0
      %209 = vmatprep.subr.mxu0 0.0
      %210 = vmatpush1.msra.mxu0 0.0
      %211 = vmatprep.subr.mxu0 0.0
      %212 = vmatpush1.msra.mxu0 0.0
      %213 = vmatprep.subr.mxu0 0.0
      %214 = vmatpush1.msra.mxu0 0.0
      %215 = vmatprep.subr.mxu0 0.0
      %216 = vmatpush1.msra.mxu0 0.0
      %217 = vmatprep.subr.mxu0 0.0
      %218 = vmatpush1.msra.mxu0 0.0
      %219 = vmatprep.subr.mxu0 0.0
      %220 = vmatpush1.msra.mxu0 0.0
      %221 = vmatprep.mubr.f32.mxu0 0.0
      %222 = vmatmul.mubr.f32.gmra.mrb[0].mxu0 %v140
      %v223 = vpop.f32.mrb[0].mxu0
      %v224 = vadd.f32 0.0, %v223
      %v225 = vpop.f32.mrb[0].mxu0
      %226 = vdwg.mxu0
      %v227 = vrsqrt.pop %v224
      %v228 = vmul.f32 %v224, %v227
      %vm229 = vcmp.eq.f32.partialorder %v224, inf
      %v230 = vsel %vm229, %v224, %v228
      %vm231 = vcmp.eq.f32.partialorder %v224, 0.0
      %v232 = vand.u32 %v224, 2147483648
      %v233 = vsel %vm231, %v232, %v230
      %vm234 = vcmask 64512
      %235 = vst.msk [vmem:[%s138] sm:$0xff] %vm234, %v233
      %p236 = scmp.lt.s32.totalorder %s13, 1
      %s237 = scalar_select %p236, %s13, 1
      %s238 = smul.addr %s237, 8
      %s239 = scalar_lea.vmem %s2, %s238
      // Predicated region
      $region29: #{l2_norm_last_dim.1} parent=27 // pred_check
        %p240 = pneg %p78
      $region30: #{l2_norm_last_dim.1} parent=27 // pred_check_branch
        %242 = sbr.rel (%p240) target = $region32
      $region31: #{l2_norm_last_dim.1} parent=27 // pred_region
        _
      $region32: #{l2_norm_last_dim.1} parent=27 // pred_fallthru
        _
    $region28: #{l2_norm_last_dim.1} parent=5 // pred_fallthru
      _
    %p243 = scmp.le.s32.totalorder 2, %s8
    // Predicated region
    $region33: #{l2_norm_last_dim.1} parent=5 // pred_check
      %p244 = pneg %p243
    $region34: #{l2_norm_last_dim.1} parent=5 // pred_check_branch
      %246 = sbr.rel (%p244) target = $region36
    $region35: #{l2_norm_last_dim.1} parent=5 // pred_region
      %s247 = ssub.s32 %s8, 2
      // Predicated region
      $region37: #{l2_norm_last_dim.1} parent=35 // pred_check
        %p248 = pneg %p84
      $region38: #{l2_norm_last_dim.1} parent=35 // pred_check_branch
        %250 = sbr.rel (%p248) target = $region40
      $region39: #{l2_norm_last_dim.1} parent=35 // pred_region
        %p251 = scmp.lt.s32.totalorder %s14, 1
        %s252 = scalar_select %p251, %s14, 1
        %s253 = smul.addr %s252, 8
        %s254 = scalar_lea.vmem %s2, %s253
      $region40: #{l2_norm_last_dim.1} parent=35 // pred_fallthru
        _
    $region36: #{l2_norm_last_dim.1} parent=5 // pred_fallthru
      _
  $region6: #{l2_norm_last_dim.1} parent=0 // loop_footer
    %s12 = sadd.s32 1, %s8
  $region7: #{l2_norm_last_dim.1} parent=0 // loop_footer_branch
    %7 = sbr.rel target = $region3
  $region8: #{l2_norm_last_dim.1} parent=0 // loop_exit
    _

</llo_original>
